<compile_context>
chip_gen: v7x
topology: tpu7x:2x2x1
jax: 0.10.0
libtpu: 0.0.40
codegen_flags: <defaults>
</compile_context>

<pallas_src>
import jax
import jax.numpy as jnp
from jax import lax
from jax.experimental import pallas as pl
from jax.experimental.pallas import tpu as pltpu

_MIN_TB = 8  # minimum batch block (output sublane granularity)


def _cdiv(a: int, b: int) -> int:
    return (a + b - 1) // b


def _round_up(n: int, m: int) -> int:
    return ((n + m - 1) // m) * m


def _vmem_capacity_bytes() -> int:
    try:
        return int(pltpu.get_tpu_info().vmem_capacity_bytes)
    except Exception:
        return 64 << 20  # conservative fallback (v7x per-TC VMEM)


def _make_mean_kernel(C: int, tc: int):
    """Kernel over a (tb, tc, F) input block with a trailing C-reduction axis."""
    ragged_c = (C % tc) != 0

    def kernel(x_ref, o_ref, acc_ref, cnt_ref):
        k = pl.program_id(1)

        @pl.when(k == 0)
        def _():
            acc_ref[...] = jnp.zeros_like(acc_ref)
            cnt_ref[...] = jnp.zeros_like(cnt_ref)

        x = x_ref[...]                                                  # (tb, tc, F) input dtype
        # Row sums accumulated in f32 (no full-tile astype materialized).
        row_sums = jnp.sum(x, axis=2, keepdims=True, dtype=jnp.float32)  # (tb, tc, 1)
        keep = row_sums != 0.0                                           # (tb, tc, 1) bool
        if ragged_c:
            # Mask the undefined rows of the ragged last C chunk.
            row_idx = lax.broadcasted_iota(jnp.int32, keep.shape, 1)
            keep = jnp.logical_and(keep, (k * tc + row_idx) < C)

        cnt_ref[...] += jnp.sum(keep.astype(jnp.float32), axis=1)        # (tb, 1)
        # Select (NaN-safe for undefined padding rows), accumulate in f32.
        acc_ref[...] += jnp.sum(jnp.where(keep, x, 0), axis=1,
                                dtype=jnp.float32)                       # (tb, F)

        @pl.when(k == pl.num_programs(1) - 1)
        def _():
            # Exact reciprocal: only tb values per tile, negligible vs. the
            # streaming reduction (approx=True would loosen the tolerance).
            inv = pl.reciprocal(cnt_ref[...], approx=False)
            o_ref[...] = (acc_ref[...] * inv).astype(o_ref.dtype)

    return kernel


def sv_feature_block_mean(x: jax.Array, *,
                          block_budget_bytes: int | None = None,
                          vmem_limit_bytes: int | None = None) -> jax.Array:
    """x: (B, C, F) -> (B, F): masked mean over C (rows with zero F-sum dropped)."""
    B, C, F = x.shape
    itemsize = jnp.dtype(x.dtype).itemsize
    per_sample = C * F * itemsize

    # Generation-aware VMEM budgeting.
    if vmem_limit_bytes is None:
        physical = _vmem_capacity_bytes()
        vmem_limit_bytes = min((physical * 3) // 4, 96 << 20)
    if block_budget_bytes is None:
        # Double-buffered input ~= half the limit; rest for output/scratch/temps.
        block_budget_bytes = max(vmem_limit_bytes // 4, 1 << 20)

    rows_fit = block_budget_bytes // max(per_sample, 1)

    if rows_fit >= B:
        tb, tc = B, C                                     # whole batch, one block
    elif rows_fit >= _MIN_TB:
        tb, tc = (rows_fit // _MIN_TB) * _MIN_TB, C       # full-C blocks of tb samples
    else:
        # One (or 8) samples exceed the block budget: chunk the C axis.
        tb = min(B, _MIN_TB)
        per_row = F * itemsize
        rows_per_chunk = block_budget_bytes // max(tb * per_row, 1)
        tc = min(C, max(_MIN_TB, (rows_per_chunk // _MIN_TB) * _MIN_TB))

    # v7x (2 TCs/chip): keep >= 2 batch grid steps so both cores get work.
    if B >= 2 * _MIN_TB:
        tb = min(tb, _round_up(_cdiv(B, 2), _MIN_TB))

    # BlockSpec legality: trailing block dims must be full or multiples of 8.
    assert tb == B or tb % 8 == 0
    assert tc == C or tc % 8 == 0

    grid_b = _cdiv(B, tb)   # ragged last batch block is fine (sliced implicitly)
    grid_c = _cdiv(C, tc)   # ragged last C chunk is masked in-kernel

    y = pl.pallas_call(
        _make_mean_kernel(C, tc),
        out_shape=jax.ShapeDtypeStruct((B, F), x.dtype),
        grid_spec=pltpu.PrefetchScalarGridSpec(
            num_scalar_prefetch=0,
            grid=(grid_b, grid_c),
            in_specs=[pl.BlockSpec((tb, tc, F), lambda b, k: (b, k, 0))],
            out_specs=pl.BlockSpec((tb, F), lambda b, k: (b, 0)),
            scratch_shapes=[
                pltpu.VMEM((tb, F), jnp.float32),   # running sum
                pltpu.VMEM((tb, 1), jnp.float32),   # surviving-row count
            ],
        ),
        compiler_params=pltpu.CompilerParams(
            dimension_semantics=("parallel", "arbitrary"),
            vmem_limit_bytes=int(vmem_limit_bytes),
        ),
    )(x)
    return y


def _reference_mean(x):
    # Pure-JAX reference mirroring the PyTorch per-sample loop.
    x32 = x.astype(jnp.float32)
    keep = (jnp.sum(x32, axis=2) != 0.0)[..., None]             # (B, C, 1)
    count = jnp.sum(keep.astype(jnp.float32), axis=1)           # (B, 1)
    total = jnp.sum(jnp.where(keep, x32, 0.0), axis=1)          # (B, F)
    return (total / count).astype(x.dtype)


if __name__ == "__main__":
    key = jax.random.PRNGKey(0)

    # Test 1: small shape consistent with the module (single full block path).
    B, C, F = 2, 8, 128
    x = jax.random.normal(key, (B, C, F), dtype=jnp.float32)
    x = x.at[0, 5:].set(0.0)   # sample 0: only rows 0..4 survive
    x = x.at[1, 2:4].set(0.0)  # sample 1: rows 2,3 dropped
    y = sv_feature_block_mean(x)
    jax.block_until_ready(y)
    assert y.shape == (B, F)
    assert jnp.allclose(y, _reference_mean(x), atol=1e-5, rtol=1e-5), "mismatch (test 1)"

    # Test 2: force a tiny block budget to exercise the ragged last batch block
    # (B=10, tb=8), the C-reduction axis (tc=8) and the ragged last C chunk
    # (C=20 -> chunks 8,8,4) with the accumulator init/finalize path.
    B2, C2, F2 = 10, 20, 128
    x2 = jax.random.normal(jax.random.PRNGKey(1), (B2, C2, F2), dtype=jnp.float32)
    x2 = x2.at[3, 7:].set(0.0)
    x2 = x2.at[9, :5].set(0.0)
    x2 = x2.at[0, 18:].set(0.0)
    y2 = sv_feature_block_mean(x2, block_budget_bytes=48 * 1024)
    jax.block_until_ready(y2)
    assert y2.shape == (B2, F2)
    assert jnp.allclose(y2, _reference_mean(x2), atol=1e-5, rtol=1e-5), "mismatch (test 2)"

    # Test 3: B >= 16 exercises the two-batch-block (v7x core split) path.
    B3, C3, F3 = 32, 8, 128
    x3 = jax.random.normal(jax.random.PRNGKey(2), (B3, C3, F3), dtype=jnp.float32)
    x3 = x3.at[5, 3:].set(0.0)
    x3 = x3.at[20, :2].set(0.0)
    y3 = sv_feature_block_mean(x3)
    jax.block_until_ready(y3)
    assert y3.shape == (B3, F3)
    assert jnp.allclose(y3, _reference_mean(x3), atol=1e-5, rtol=1e-5), "mismatch (test 3)"

    print("KERNEL_OK")
</pallas_src>

<mosaic_0001>
module attributes {stable_mosaic.version = 11 : i64} {
  func.func @kernel(%arg0: i32, %arg1: i32, %arg2: memref<2x8x128xf32, #tpu.memory_space<vmem>>, %arg3: memref<2x128xf32, #tpu.memory_space<vmem>>, %arg4: memref<2x128xf32, #tpu.memory_space<vmem>>, %arg5: memref<2x1xf32, #tpu.memory_space<vmem>>) attributes {dimension_semantics = [#tpu.dimension_semantics<parallel>, #tpu.dimension_semantics<arbitrary>], iteration_bounds = array<i64: 1, 1>, scalar_prefetch = 0 : i64, scratch_operands = 2 : i64, tpu.core_type = #tpu.core_type<tc>, window_params = [{transform_indices = @transform_0, window_bounds = array<i64: 2, 8, 128>}, {transform_indices = @transform_1, window_bounds = array<i64: 2, 128>}]} {
    %c0_i32 = arith.constant 0 : i32
    %0 = arith.cmpi eq, %arg1, %c0_i32 : i32
    %1 = arith.extui %0 : i1 to i32
    %c0_i32_0 = arith.constant 0 : i32
    %2 = arith.cmpi ne, %1, %c0_i32_0 : i32
    scf.if %2 {
      %cst_17 = arith.constant 0.000000e+00 : f32
      %26 = vector.broadcast %cst_17 : f32 to vector<2x128xf32>
      %c0_18 = arith.constant 0 : index
      %c0_19 = arith.constant 0 : index
      %27 = vector.load %arg4[%c0_18, %c0_19] : memref<2x128xf32, #tpu.memory_space<vmem>>, vector<2x128xf32>
      tpu.vector_store %arg4[%c0_18, %c0_19], %26 {strides = array<i32>} : memref<2x128xf32, #tpu.memory_space<vmem>>, vector<2x128xf32>,
      %cst_20 = arith.constant 0.000000e+00 : f32
      %28 = vector.broadcast %cst_20 : f32 to vector<2x1xf32>
      %c0_21 = arith.constant 0 : index
      %c0_22 = arith.constant 0 : index
      %29 = vector.load %arg5[%c0_21, %c0_22] : memref<2x1xf32, #tpu.memory_space<vmem>>, vector<2x1xf32>
      tpu.vector_store %arg5[%c0_21, %c0_22], %28 {strides = array<i32>} : memref<2x1xf32, #tpu.memory_space<vmem>>, vector<2x1xf32>,
    } else {
    }
    %c0 = arith.constant 0 : index
    %c0_1 = arith.constant 0 : index
    %c0_2 = arith.constant 0 : index
    %3 = vector.load %arg2[%c0, %c0_1, %c0_2] : memref<2x8x128xf32, #tpu.memory_space<vmem>>, vector<2x8x128xf32>
    %cst = arith.constant dense<0.000000e+00> : vector<2x8xf32>
    %4 = vector.multi_reduction <add>, %3, %cst [2] : vector<2x8x128xf32> to vector<2x8xf32>
    %5 = vector.shape_cast %4 : vector<2x8xf32> to vector<2x8x1xf32>
    %cst_3 = arith.constant 0.000000e+00 : f32
    %6 = vector.broadcast %cst_3 : f32 to vector<2x8x1xf32>
    %7 = arith.cmpf one, %5, %6 : vector<2x8x1xf32>
    %c0_4 = arith.constant 0 : index
    %c0_5 = arith.constant 0 : index
    %8 = vector.load %arg5[%c0_4, %c0_5] : memref<2x1xf32, #tpu.memory_space<vmem>>, vector<2x1xf32>
    %9 = arith.extui %7 : vector<2x8x1xi1> to vector<2x8x1xi32>
    %10 = arith.sitofp %9 : vector<2x8x1xi32> to vector<2x8x1xf32>
    %cst_6 = arith.constant dense<0.000000e+00> : vector<2x1xf32>
    %11 = vector.multi_reduction <add>, %10, %cst_6 [1] : vector<2x8x1xf32> to vector<2x1xf32>
    %12 = arith.addf %8, %11 : vector<2x1xf32>
    %c0_7 = arith.constant 0 : index
    %c0_8 = arith.constant 0 : index
    %13 = vector.load %arg5[%c0_7, %c0_8] : memref<2x1xf32, #tpu.memory_space<vmem>>, vector<2x1xf32>
    tpu.vector_store %arg5[%c0_7, %c0_8], %12 {strides = array<i32>} : memref<2x1xf32, #tpu.memory_space<vmem>>, vector<2x1xf32>,
    %c0_9 = arith.constant 0 : index
    %c0_10 = arith.constant 0 : index
    %14 = vector.load %arg4[%c0_9, %c0_10] : memref<2x128xf32, #tpu.memory_space<vmem>>, vector<2x128xf32>
    %c0_i32_11 = arith.constant 0 : i32
    %15 = arith.sitofp %c0_i32_11 : i32 to f32
    %16 = vector.shape_cast %7 : vector<2x8x1xi1> to vector<2x8x1xi1>
    %17 = vector.broadcast %16 : vector<2x8x1xi1> to vector<2x8x128xi1>
    %18 = vector.broadcast %15 : f32 to vector<2x8x128xf32>
    %19 = arith.select %17, %3, %18 : vector<2x8x128xi1>, vector<2x8x128xf32>
    %cst_12 = arith.constant dense<0.000000e+00> : vector<2x128xf32>
    %20 = vector.multi_reduction <add>, %19, %cst_12 [1] : vector<2x8x128xf32> to vector<2x128xf32>
    %21 = arith.addf %14, %20 : vector<2x128xf32>
    %c0_13 = arith.constant 0 : index
    %c0_14 = arith.constant 0 : index
    %22 = vector.load %arg4[%c0_13, %c0_14] : memref<2x128xf32, #tpu.memory_space<vmem>>, vector<2x128xf32>
    tpu.vector_store %arg4[%c0_13, %c0_14], %21 {strides = array<i32>} : memref<2x128xf32, #tpu.memory_space<vmem>>, vector<2x128xf32>,
    %c0_i32_15 = arith.constant 0 : i32
    %23 = arith.cmpi eq, %arg1, %c0_i32_15 : i32
    %24 = arith.extui %23 : i1 to i32
    %c0_i32_16 = arith.constant 0 : i32
    %25 = arith.cmpi ne, %24, %c0_i32_16 : i32
    scf.if %25 {
      %c0_17 = arith.constant 0 : index
      %c0_18 = arith.constant 0 : index
      %26 = vector.load %arg5[%c0_17, %c0_18] : memref<2x1xf32, #tpu.memory_space<vmem>>, vector<2x1xf32>
      %27 = tpu.reciprocal %26 : vector<2x1xf32> -> vector<2x1xf32>
      %c0_19 = arith.constant 0 : index
      %c0_20 = arith.constant 0 : index
      %28 = vector.load %arg4[%c0_19, %c0_20] : memref<2x128xf32, #tpu.memory_space<vmem>>, vector<2x128xf32>
      %29 = vector.broadcast %27 : vector<2x1xf32> to vector<2x128xf32>
      %30 = arith.mulf %28, %29 : vector<2x128xf32>
      %c0_21 = arith.constant 0 : index
      %c0_22 = arith.constant 0 : index
      %31 = vector.load %arg3[%c0_21, %c0_22] : memref<2x128xf32, #tpu.memory_space<vmem>>, vector<2x128xf32>
      tpu.vector_store %arg3[%c0_21, %c0_22], %30 {strides = array<i32>} : memref<2x128xf32, #tpu.memory_space<vmem>>, vector<2x128xf32>,
    } else {
    }
    return
  }
  func.func @transform_0(%arg0: i32, %arg1: i32) -> (i32, i32, i32) {
    %c0_i32 = arith.constant 0 : i32
    %c0_i32_0 = arith.constant 0 : i32
    return %arg0, %arg1, %c0_i32 : i32, i32, i32
  }
  func.func @transform_1(%arg0: i32, %arg1: i32) -> (i32, i32) {
    %c0_i32 = arith.constant 0 : i32
    %c0_i32_0 = arith.constant 0 : i32
    return %arg0, %c0_i32 : i32, i32
  }
}

</mosaic_0001>

<llo_original>
// kernel: tpu_custom_call.1
$region0: #{tpu_custom_call.1}
  #allocation0 [shape = 'u32[]', space=smem, size = 0x4, offset = 0x4, fixed_abs, tag = 'smem constant byte address 0x4 - core index']
  #allocation1 [shape = 'u32[144,128]{1,0:T(1,128)}', space=vmem, size = 0x12000, scoped, tag = 'internal scratch']
  #allocation2 [shape = 'f32[2,128]{1,0:T(2,128)}', space=vmem, size = 0x400, scoped, tag = 'scratch operand']
  #allocation3 [shape = 'f32[2,1]{1,0:T(2,128)}', space=vmem, size = 0x400, scoped, tag = 'scratch operand']
  %s0 = inlined_call_operand.hbm [shape: f32[2,8,128], index: 0, kind: input, shape index: {}]
  %s1 = inlined_call_operand.hbm [shape: f32[2,128], index: 1, kind: output, shape index: {}]
  %s2 = sld [smem:[#allocation0]]
  $region26: #{tpu_custom_call.1} parent=0
    _
  %s4 = ssub.s32 1, %s2
  %s5 = scalar_select 0, %s4, %s2
  $region1: #{tpu_custom_call.1} parent=0
    #allocation4 [shape = 'u8[8192]{0}', space=vmem, size = 0x2000, scoped, tag = 'input window, operand 0, single buffered']
    #allocation5 [shape = 's32[1]{0}', space=sflag, size = 0x4, scoped, tag = 'scoped memory for tpu_custom_call.1']
    #allocation6 [shape = 's32[1]{0}', space=sflag, size = 0x4, scoped, tag = 'scoped memory for tpu_custom_call.1']
    #allocation7 [shape = 'u8[1024]{0}', space=vmem, size = 0x400, scoped, tag = 'output window, operand 0, single buffered']
    %6 = vsyncpa [#allocation5], 0
    %7 = vsyncpa [#allocation6], 0
    // Predicated region
    $region2: #{tpu_custom_call.1} parent=1 // pred_check
      _
    $region3: #{tpu_custom_call.1} parent=1 // pred_check_branch
      %9 = sbr.rel (0) target = $region5
    $region4: #{tpu_custom_call.1} parent=1 // pred_region
      %s11 = ssub.s32 256, 256
      %12 = vsyncadd [#allocation5], %s11
      %s13 = sshll.u32 [#allocation4], 4
      %s14 = int_to_ptr.vmem [resolvable:$true] %s13
      %19 = dma.hbm_to_vmem [thread:$0]  %s0, 256, %s14, [#allocation5], 128, 128, 8
    $region5: #{tpu_custom_call.1} parent=1 // pred_fallthru
      _
    // Predicated region
    $region6: #{tpu_custom_call.1} parent=1 // pred_check
      _
    $region7: #{tpu_custom_call.1} parent=1 // pred_check_branch
      %21 = sbr.rel (0) target = $region9
    $region8: #{tpu_custom_call.1} parent=1 // pred_region
      %22 = dma.done [#allocation5], 256
    $region9: #{tpu_custom_call.1} parent=1 // pred_fallthru
      _
    %p23 = scmp.eq.s32.totalorder 0, 0
    // Predicated region
    $region10: #{tpu_custom_call.1} parent=1 // pred_check
      %p24 = pneg %p23
    $region11: #{tpu_custom_call.1} parent=1 // pred_check_branch
      %26 = sbr.rel (%p24) target = $region13
    $region12: #{tpu_custom_call.1} parent=1 // pred_region
      %27 = vst [vmem:[#allocation2] sm:$0x3] 0.0
      %vm28 = vcmask 1024
      %29 = vst.msk [vmem:[#allocation3] sm:$0x3] %vm28, 0.0
    $region13: #{tpu_custom_call.1} parent=1 // pred_fallthru
      _
    %v30 = vld [vmem:[#allocation4] sm:$0xff]
    %v31 = vld [vmem:[#allocation4 + $0x8] sm:$0xff]
    %32 = vadd.xlane.f32.xlu0 %v30
    %v33 = vpop.xlane.xlu0 %32
    %34 = vadd.xlane.f32.xlu0 %v31
    %v35 = vpop.xlane.xlu0 %34
    %vm36 = vcmp.ne.f32.partialorder %v33, 0.0
    %vm37 = vcmp.ne.f32.partialorder %v35, 0.0
    %v38 = vld [vmem:[#allocation3] sm:$0x3]
    %v39 = vsel %vm36, 1, 0
    %v40 = vsel %vm37, 1, 0
    %v41 = vcvt.s32.f32 %v39
    %v42 = vcvt.s32.f32 %v40
    %v43 = vrot.slane %v41, 4
    %v44 = vadd.f32 %v41, %v43
    %v45 = vrot.slane %v44, 2
    %v46 = vadd.f32 %v44, %v45
    %v47 = vrot.slane %v46, 1
    %v48 = vadd.f32 %v46, %v47
    %v49 = vrot.slane %v42, 4
    %v50 = vadd.f32 %v42, %v49
    %v51 = vrot.slane %v50, 2
    %v52 = vadd.f32 %v50, %v51
    %v53 = vrot.slane %v52, 1
    %v54 = vadd.f32 %v52, %v53
    %vm57 = vcmask 1041409
    %v58 = vsel %vm57, %v54, %v48
    %v60 = vadd.f32 %v38, %v58
    %vm61 = vcmask 1024
    %62 = vst.msk [vmem:[#allocation3] sm:$0x3] %vm61, %v60
    %v63 = vld [vmem:[#allocation2] sm:$0x3]
    %vm64 = vcmp.eq.s32.totalorder %v39, 1
    %vm65 = vcmp.eq.s32.totalorder %v40, 1
    %v66 = vsel %vm64, %v30, 0.0
    %v67 = vsel %vm65, %v31, 0.0
    %v68 = vrot.slane %v66, 4
    %v69 = vadd.f32 %v66, %v68
    %v70 = vrot.slane %v69, 2
    %v71 = vadd.f32 %v69, %v70
    %v72 = vrot.slane %v71, 1
    %v73 = vadd.f32 %v71, %v72
    %v74 = vrot.slane %v67, 4
    %v75 = vadd.f32 %v67, %v74
    %v76 = vrot.slane %v75, 2
    %v77 = vadd.f32 %v75, %v76
    %v78 = vrot.slane %v77, 1
    %v79 = vadd.f32 %v77, %v78
    %v82 = vsel %vm57, %v79, %v73
    %v84 = vadd.f32 %v63, %v82
    %85 = vst [vmem:[#allocation2] sm:$0x3] %v84
    // Predicated region
    $region14: #{tpu_custom_call.1} parent=1 // pred_check
      %p86 = pneg %p23
    $region15: #{tpu_custom_call.1} parent=1 // pred_check_branch
      %88 = sbr.rel (%p86) target = $region17
    $region16: #{tpu_custom_call.1} parent=1 // pred_region
      %v89 = vld [vmem:[#allocation3] sm:$0x3]
      %v90 = vrcp.pop %v89
      %v91 = vld [vmem:[#allocation2] sm:$0x3]
      %93 = vset.pattern.permute.xlu0 0
      %94 = vperm.xlu0 %93, %v90
      %v95 = vpop.permute.xlu0 %94
      %v97 = vmul.f32 %v91, %v95
      %98 = vst [vmem:[#allocation7] sm:$0x3] %v97
    $region17: #{tpu_custom_call.1} parent=1 // pred_fallthru
      _
    // Predicated region
    $region18: #{tpu_custom_call.1} parent=1 // pred_check
      _
    $region19: #{tpu_custom_call.1} parent=1 // pred_check_branch
      %100 = sbr.rel (0) target = $region21
    $region20: #{tpu_custom_call.1} parent=1 // pred_region
      %s102 = ssub.s32 32, 32
      %103 = vsyncadd [#allocation6], %s102
      %s105 = sshll.u32 [#allocation7], 4
      %s106 = int_to_ptr.vmem [resolvable:$true] %s105
      %108 = dma.vmem_to_hbm [thread:$0]  %s106, 32, %s1, [#allocation6]
    $region21: #{tpu_custom_call.1} parent=1 // pred_fallthru
      _
    // Predicated region
    $region22: #{tpu_custom_call.1} parent=1 // pred_check
      _
    $region23: #{tpu_custom_call.1} parent=1 // pred_check_branch
      %110 = sbr.rel (0) target = $region25
    $region24: #{tpu_custom_call.1} parent=1 // pred_region
      %111 = dma.done [#allocation6], 32
    $region25: #{tpu_custom_call.1} parent=1 // pred_fallthru
      _
    %112 = vsyncpa [#allocation5], 1
    %113 = vsyncpa [#allocation6], 1

</llo_original>
